<compile_context>
chip_gen: v5e
topology: v5e:2x2
jax: 0.10.0
libtpu: 0.0.40
codegen_flags: <defaults>
</compile_context>

<pallas_src>
import functools

import jax
import jax.numpy as jnp
from jax.experimental import pallas as pl
from jax.experimental.pallas import tpu as pltpu

_LANE = 128      # lane width: keep lane-axis dims multiples of this
_SUBLANE = 8     # f32 sublane height (bf16 packs 2x -> use 16 for bf16 rows)


def _round_up(n, m):
    return ((n + m - 1) // m) * m


# --------------------------------------------------------------------------
# Kernel: two fused message-passing convolutions (all operands pre-padded).
# --------------------------------------------------------------------------
def _ccxn_fused_kernel(x0r_ref, w00_ref, n00_ref, x1r_ref, w12_ref, n12_ref,
                       x0_out_ref, x2_out_ref):
    """Fused CCXN forward.

    x0r_ref    : [n0p, c0p] matmul_dtype  relu(x0) (ReLU'd + cast in wrapper)
    w00_ref    : [c0p, c0p] matmul_dtype  node->node weight
    n00_ref    : [n0p, n0p] matmul_dtype  A_0_up (densified {0,1}, exact in bf16)
    x1r_ref    : [n1p, c1p] matmul_dtype  relu(x1)
    w12_ref    : [c1p, c2p] matmul_dtype  edge->face weight
    n12_ref    : [n2p, n1p] matmul_dtype  B_2^T (densified {0,1})
    x0_out_ref : [n0p, c0p] f32           relu(A_0_up @ (relu(x0) @ W00))
    x2_out_ref : [n2p, c2p] f32           relu(B_2^T @ (relu(x1) @ W12))
    """
    # ---- node -> node (adjacency message passing) ----
    xw0 = jnp.dot(x0r_ref[...], w00_ref[...],
                  preferred_element_type=jnp.float32)          # MXU, f32 acc
    m0 = jnp.dot(n00_ref[...], xw0.astype(n00_ref.dtype),
                 preferred_element_type=jnp.float32)           # MXU, f32 acc
    x0_out_ref[...] = jnp.maximum(m0, 0.0).astype(x0_out_ref.dtype)

    # ---- edge -> face (coboundary message passing) ----
    xw1 = jnp.dot(x1r_ref[...], w12_ref[...],
                  preferred_element_type=jnp.float32)
    m2 = jnp.dot(n12_ref[...], xw1.astype(n12_ref.dtype),
                 preferred_element_type=jnp.float32)
    x2_out_ref[...] = jnp.maximum(m2, 0.0).astype(x2_out_ref.dtype)


# --------------------------------------------------------------------------
# One-time preparation (hoisted out of the per-call path).
# --------------------------------------------------------------------------
def prepare_weights(w_0_to_0, w_1_to_2, matmul_dtype=jnp.bfloat16):
    """Pad (lane-dense) + cast the weights once. Cast BEFORE pad."""
    c0 = w_0_to_0.shape[0]
    c1, c2 = w_1_to_2.shape
    c0p, c1p, c2p = (_round_up(c, _LANE) for c in (c0, c1, c2))
    w00p = jnp.pad(w_0_to_0.astype(matmul_dtype), ((0, c0p - c0), (0, c0p - c0)))
    w12p = jnp.pad(w_1_to_2.astype(matmul_dtype), ((0, c1p - c1), (0, c2p - c2)))
    return w00p, w12p


def prepare_neighborhoods(neighborhood_0_to_0, neighborhood_1_to_2,
                          matmul_dtype=jnp.bfloat16):
    """Densified {0,1} neighborhoods, padded + cast once (exact in bf16).

    n0 / n1 land on the lane axis of the neighborhood matrices (and are the
    contraction dims of the second matmuls) -> pad to multiples of 128.
    n2 is only a bf16 row dim -> multiple of 16 suffices.
    """
    n0 = neighborhood_0_to_0.shape[0]
    n2, n1 = neighborhood_1_to_2.shape
    n0p = _round_up(n0, _LANE)
    n1p = _round_up(n1, _LANE)
    n2p = _round_up(n2, 2 * _SUBLANE)
    n00p = jnp.pad(neighborhood_0_to_0.astype(matmul_dtype),
                   ((0, n0p - n0), (0, n0p - n0)))
    n12p = jnp.pad(neighborhood_1_to_2.astype(matmul_dtype),
                   ((0, n2p - n2), (0, n1p - n1)))
    return n00p, n12p


# --------------------------------------------------------------------------
# Jitted forward: cheap activation prologue + single fused pallas_call.
# --------------------------------------------------------------------------
@functools.partial(jax.jit, static_argnames=("n2_cells", "out_channels_2"))
def ccxn_forward(x_0, x_1, w00p, w12p, n00p, n12p, *, n2_cells, out_channels_2):
    """CCXN forward with pre-padded weights/neighborhoods.

    Returns (x0_out, relu(x1), x2_out) at the original (unpadded) shapes.
    """
    n0, c0 = x_0.shape
    n1, c1 = x_1.shape
    n0p = n00p.shape[0]
    n2p, n1p = n12p.shape
    c0p = w00p.shape[0]
    c1p, c2p = w12p.shape
    mdt = w00p.dtype
    m_bytes = jnp.dtype(mdt).itemsize

    # relu(x1) is returned exactly in f32 (computed here, fused with the pads).
    x1_relu = jnp.maximum(x_1.astype(jnp.float32), 0.0)

    # Activations: ReLU + cast to matmul_dtype BEFORE pad (relu commutes
    # exactly with the sign-preserving bf16 cast), pad rows/lanes to the
    # resident block shapes.
    x0rp = jnp.pad(jnp.maximum(x_0, 0.0).astype(mdt),
                   ((0, n0p - n0), (0, c0p - c0)))
    x1rp = jnp.pad(x1_relu.astype(mdt),
                   ((0, n1p - n1), (0, c1p - c1)))

    flops = 2 * (n0p * c0p * c0p + n0p * n0p * c0p
                 + n1p * c1p * c2p + n2p * n1p * c2p)
    in_bytes = (n0p * c0p + n1p * c1p                 # activations (matmul_dtype)
                + c0p * c0p + c1p * c2p               # weights
                + n0p * n0p + n2p * n1p) * m_bytes    # neighborhood matrices
    out_bytes = (n0p * c0p + n2p * c2p) * 4           # f32 outputs
    bytes_accessed = in_bytes + out_bytes

    # grid=(1,) full residency; allow double-buffer headroom but never ask for
    # more than is sensible (v7x physical VMEM is 64 MiB).
    vmem_limit = int(min(64 * 1024 * 1024,
                         max(32 * 1024 * 1024, 4 * bytes_accessed)))

    x0_out, x2_out = pl.pallas_call(
        _ccxn_fused_kernel,
        grid=(1,),  # tiny problem: single step, full-array blocks resident in VMEM
        in_specs=[
            pl.BlockSpec((n0p, c0p), lambda i: (0, 0)),   # relu(x0)
            pl.BlockSpec((c0p, c0p), lambda i: (0, 0)),   # W_0to0
            pl.BlockSpec((n0p, n0p), lambda i: (0, 0)),   # A_0_up
            pl.BlockSpec((n1p, c1p), lambda i: (0, 0)),   # relu(x1)
            pl.BlockSpec((c1p, c2p), lambda i: (0, 0)),   # W_1to2
            pl.BlockSpec((n2p, n1p), lambda i: (0, 0)),   # B_2^T
        ],
        out_specs=(
            pl.BlockSpec((n0p, c0p), lambda i: (0, 0)),
            pl.BlockSpec((n2p, c2p), lambda i: (0, 0)),
        ),
        out_shape=(
            jax.ShapeDtypeStruct((n0p, c0p), jnp.float32),
            jax.ShapeDtypeStruct((n2p, c2p), jnp.float32),
        ),
        cost_estimate=pl.CostEstimate(
            flops=flops, transcendentals=0, bytes_accessed=bytes_accessed),
        compiler_params=pltpu.CompilerParams(
            dimension_semantics=("arbitrary",),
            vmem_limit_bytes=vmem_limit),
    )(x0rp, w00p, n00p, x1rp, w12p, n12p)

    # Strip the padding back off.
    return (x0_out[:n0, :c0], x1_relu[:n1, :c1],
            x2_out[:n2_cells, :out_channels_2])


# --------------------------------------------------------------------------
# Module-like wrapper.
# --------------------------------------------------------------------------
class CCXNLayerPallas:
    """JAX/Pallas port of CCXNLayer (att=False)."""

    def __init__(self, in_channels_0, in_channels_1, in_channels_2, key,
                 matmul_dtype=jnp.bfloat16):
        k0, k1 = jax.random.split(key)
        gain = 1.414  # xavier-uniform gain as in topomodelx Conv

        def xavier(k, fan_in, fan_out):
            a = gain * jnp.sqrt(6.0 / (fan_in + fan_out))
            return jax.random.uniform(
                k, (fan_in, fan_out), dtype=jnp.float32, minval=-a, maxval=a)

        # Unpadded f32 weights kept for reference / export.
        self.w_0_to_0 = xavier(k0, in_channels_0, in_channels_0)
        self.w_1_to_2 = xavier(k1, in_channels_1, in_channels_2)
        self.out_channels_2 = in_channels_2
        self.matmul_dtype = matmul_dtype
        # One-time pad + cast of the weights (hoisted out of the call path).
        self._w00p, self._w12p = prepare_weights(
            self.w_0_to_0, self.w_1_to_2, matmul_dtype)

    def prepare_neighborhoods(self, neighborhood_0_to_0, neighborhood_1_to_2):
        """Pad/cast the (reusable) neighborhood matrices once."""
        n00p, n12p = prepare_neighborhoods(
            neighborhood_0_to_0, neighborhood_1_to_2, self.matmul_dtype)
        return (n00p, n12p, int(neighborhood_1_to_2.shape[0]))

    def __call__(self, x_0, x_1, neighborhood_0_to_0=None,
                 neighborhood_1_to_2=None, x_2=None, prepared=None):
        if prepared is None:
            prepared = self.prepare_neighborhoods(
                neighborhood_0_to_0, neighborhood_1_to_2)
        n00p, n12p, n2_cells = prepared
        return ccxn_forward(
            x_0, x_1, self._w00p, self._w12p, n00p, n12p,
            n2_cells=n2_cells, out_channels_2=self.out_channels_2)


def _reference(x_0, x_1, n00, n12, w00, w12):
    """Pure-JAX f32 reference matching the PyTorch forward."""
    x0r = jnp.maximum(x_0, 0.0)
    x1r = jnp.maximum(x_1, 0.0)
    x0_out = jnp.maximum(n00 @ (x0r @ w00), 0.0)
    x2_out = jnp.maximum(n12 @ (x1r @ w12), 0.0)
    return x0_out, x1r, x2_out


if __name__ == "__main__":
    key = jax.random.PRNGKey(0)
    k_x0, k_x1, k_n00, k_n12, k_params = jax.random.split(key, 5)

    # Small synthetic cell complex sizes.
    n_0_cells, n_1_cells, n_2_cells = 16, 32, 8
    in_channels_0, in_channels_1, in_channels_2 = 32, 32, 16

    x_0 = jax.random.normal(k_x0, (n_0_cells, in_channels_0), dtype=jnp.float32)
    x_1 = jax.random.normal(k_x1, (n_1_cells, in_channels_1), dtype=jnp.float32)

    # Densified sparse neighborhood matrices: A_0_up and B_2^T with {0,1} entries.
    neighborhood_0_to_0 = (
        jax.random.uniform(k_n00, (n_0_cells, n_0_cells)) < 0.3
    ).astype(jnp.float32)
    neighborhood_1_to_2 = (
        jax.random.uniform(k_n12, (n_2_cells, n_1_cells)) < 0.3
    ).astype(jnp.float32)

    layer = CCXNLayerPallas(in_channels_0, in_channels_1, in_channels_2, k_params)

    # Hoisted prologue: pad/cast the reusable neighborhoods ONCE.
    prepared = layer.prepare_neighborhoods(neighborhood_0_to_0,
                                           neighborhood_1_to_2)

    # Fast path: bf16 MXU operands, f32 accumulation/elementwise.
    x0_out, x1_out, x2_out = layer(x_0, x_1, prepared=prepared)
    jax.block_until_ready((x0_out, x1_out, x2_out))

    r0, r1, r2 = _reference(
        x_0, x_1, neighborhood_0_to_0, neighborhood_1_to_2,
        layer.w_0_to_0, layer.w_1_to_2)

    assert x0_out.shape == (n_0_cells, in_channels_0)
    assert x1_out.shape == (n_1_cells, in_channels_1)
    assert x2_out.shape == (n_2_cells, in_channels_2)
    # relu(x1) is a pure f32 passthrough -> exact.
    assert jnp.allclose(x1_out, r1, atol=1e-6)
    # bf16 matmul operands with f32 accumulation (+ bf16 re-round of xw) ->
    # small, bounded rounding.
    assert jnp.allclose(x0_out, r0, atol=5e-2, rtol=5e-2)
    assert jnp.allclose(x2_out, r2, atol=5e-2, rtol=5e-2)

    # Exact f32 path sanity check (same kernel; debug/correctness only —
    # f32 MXU matmuls are multi-pass and slow on all TPU generations).
    w00p_f32, w12p_f32 = prepare_weights(layer.w_0_to_0, layer.w_1_to_2,
                                         jnp.float32)
    n00p_f32, n12p_f32 = prepare_neighborhoods(neighborhood_0_to_0,
                                               neighborhood_1_to_2, jnp.float32)
    e0, e1, e2 = ccxn_forward(
        x_0, x_1, w00p_f32, w12p_f32, n00p_f32, n12p_f32,
        n2_cells=n_2_cells, out_channels_2=in_channels_2)
    jax.block_until_ready((e0, e1, e2))
    assert jnp.allclose(e0, r0, atol=1e-4, rtol=1e-4)
    assert jnp.allclose(e1, r1, atol=1e-6)
    assert jnp.allclose(e2, r2, atol=1e-4, rtol=1e-4)

    print("KERNEL_OK")
</pallas_src>

<mosaic_0001>
module attributes {stable_mosaic.version = 11 : i64} {
  func.func @_ccxn_fused_kernel(%arg0: i32, %arg1: memref<128x128xbf16, #tpu.memory_space<vmem>>, %arg2: memref<128x128xbf16, #tpu.memory_space<vmem>>, %arg3: memref<128x128xbf16, #tpu.memory_space<vmem>>, %arg4: memref<128x128xbf16, #tpu.memory_space<vmem>>, %arg5: memref<128x128xbf16, #tpu.memory_space<vmem>>, %arg6: memref<16x128xbf16, #tpu.memory_space<vmem>>, %arg7: memref<128x128xf32, #tpu.memory_space<vmem>>, %arg8: memref<16x128xf32, #tpu.memory_space<vmem>>) attributes {dimension_semantics = [#tpu.dimension_semantics<arbitrary>], iteration_bounds = array<i64: 1>, scalar_prefetch = 0 : i64, scratch_operands = 0 : i64, tpu.core_type = #tpu.core_type<tc>, window_params = [{pipeline_mode = #tpu.pipeline_mode<synchronous>, transform_indices = @transform_0, window_bounds = array<i64: 128, 128>}, {pipeline_mode = #tpu.pipeline_mode<synchronous>, transform_indices = @transform_1, window_bounds = array<i64: 128, 128>}, {pipeline_mode = #tpu.pipeline_mode<synchronous>, transform_indices = @transform_2, window_bounds = array<i64: 128, 128>}, {pipeline_mode = #tpu.pipeline_mode<synchronous>, transform_indices = @transform_3, window_bounds = array<i64: 128, 128>}, {pipeline_mode = #tpu.pipeline_mode<synchronous>, transform_indices = @transform_4, window_bounds = array<i64: 128, 128>}, {pipeline_mode = #tpu.pipeline_mode<synchronous>, transform_indices = @transform_5, window_bounds = array<i64: 16, 128>}, {pipeline_mode = #tpu.pipeline_mode<synchronous>, transform_indices = @transform_6, window_bounds = array<i64: 128, 128>}, {pipeline_mode = #tpu.pipeline_mode<synchronous>, transform_indices = @transform_7, window_bounds = array<i64: 16, 128>}]} {
    %c0 = arith.constant 0 : index
    %c0_0 = arith.constant 0 : index
    %0 = vector.load %arg1[%c0, %c0_0] : memref<128x128xbf16, #tpu.memory_space<vmem>>, vector<128x128xbf16>
    %c0_1 = arith.constant 0 : index
    %c0_2 = arith.constant 0 : index
    %1 = vector.load %arg2[%c0_1, %c0_2] : memref<128x128xbf16, #tpu.memory_space<vmem>>, vector<128x128xbf16>
    %cst = arith.constant dense<0.000000e+00> : vector<128x128xf32>
    %2 = tpu.matmul %0, %1, %cst {dimension_numbers = #tpu.dot_dimension_numbers<[1], [0], [0], [1], [0, 0, 1, 1], [], []>} : vector<128x128xbf16>, vector<128x128xbf16>, vector<128x128xf32> -> vector<128x128xf32>
    %c0_3 = arith.constant 0 : index
    %c0_4 = arith.constant 0 : index
    %3 = vector.load %arg3[%c0_3, %c0_4] : memref<128x128xbf16, #tpu.memory_space<vmem>>, vector<128x128xbf16>
    %4 = arith.truncf %2 : vector<128x128xf32> to vector<128x128xbf16>
    %cst_5 = arith.constant dense<0.000000e+00> : vector<128x128xf32>
    %5 = tpu.matmul %3, %4, %cst_5 {dimension_numbers = #tpu.dot_dimension_numbers<[1], [0], [0], [1], [0, 0, 1, 1], [], []>} : vector<128x128xbf16>, vector<128x128xbf16>, vector<128x128xf32> -> vector<128x128xf32>
    %cst_6 = arith.constant 0.000000e+00 : f32
    %6 = vector.broadcast %cst_6 : f32 to vector<128x128xf32>
    %7 = arith.maximumf %5, %6 : vector<128x128xf32>
    %c0_7 = arith.constant 0 : index
    %c0_8 = arith.constant 0 : index
    %8 = vector.load %arg7[%c0_7, %c0_8] : memref<128x128xf32, #tpu.memory_space<vmem>>, vector<128x128xf32>
    tpu.vector_store %arg7[%c0_7, %c0_8], %7 {strides = array<i32>} : memref<128x128xf32, #tpu.memory_space<vmem>>, vector<128x128xf32>,
    %c0_9 = arith.constant 0 : index
    %c0_10 = arith.constant 0 : index
    %9 = vector.load %arg4[%c0_9, %c0_10] : memref<128x128xbf16, #tpu.memory_space<vmem>>, vector<128x128xbf16>
    %c0_11 = arith.constant 0 : index
    %c0_12 = arith.constant 0 : index
    %10 = vector.load %arg5[%c0_11, %c0_12] : memref<128x128xbf16, #tpu.memory_space<vmem>>, vector<128x128xbf16>
    %cst_13 = arith.constant dense<0.000000e+00> : vector<128x128xf32>
    %11 = tpu.matmul %9, %10, %cst_13 {dimension_numbers = #tpu.dot_dimension_numbers<[1], [0], [0], [1], [0, 0, 1, 1], [], []>} : vector<128x128xbf16>, vector<128x128xbf16>, vector<128x128xf32> -> vector<128x128xf32>
    %c0_14 = arith.constant 0 : index
    %c0_15 = arith.constant 0 : index
    %12 = vector.load %arg6[%c0_14, %c0_15] : memref<16x128xbf16, #tpu.memory_space<vmem>>, vector<16x128xbf16>
    %13 = arith.truncf %11 : vector<128x128xf32> to vector<128x128xbf16>
    %cst_16 = arith.constant dense<0.000000e+00> : vector<16x128xf32>
    %14 = tpu.matmul %12, %13, %cst_16 {dimension_numbers = #tpu.dot_dimension_numbers<[1], [0], [0], [1], [0, 0, 1, 1], [], []>} : vector<16x128xbf16>, vector<128x128xbf16>, vector<16x128xf32> -> vector<16x128xf32>
    %cst_17 = arith.constant 0.000000e+00 : f32
    %15 = vector.broadcast %cst_17 : f32 to vector<16x128xf32>
    %16 = arith.maximumf %14, %15 : vector<16x128xf32>
    %c0_18 = arith.constant 0 : index
    %c0_19 = arith.constant 0 : index
    %17 = vector.load %arg8[%c0_18, %c0_19] : memref<16x128xf32, #tpu.memory_space<vmem>>, vector<16x128xf32>
    tpu.vector_store %arg8[%c0_18, %c0_19], %16 {strides = array<i32>} : memref<16x128xf32, #tpu.memory_space<vmem>>, vector<16x128xf32>,
    return
  }
  func.func @transform_0(%arg0: i32) -> (i32, i32) {
    %c0_i32 = arith.constant 0 : i32
    %c0_i32_0 = arith.constant 0 : i32
    %c0_i32_1 = arith.constant 0 : i32
    return %c0_i32, %c0_i32_0 : i32, i32
  }
  func.func @transform_1(%arg0: i32) -> (i32, i32) {
    %c0_i32 = arith.constant 0 : i32
    %c0_i32_0 = arith.constant 0 : i32
    %c0_i32_1 = arith.constant 0 : i32
    return %c0_i32, %c0_i32_0 : i32, i32
  }
  func.func @transform_2(%arg0: i32) -> (i32, i32) {
    %c0_i32 = arith.constant 0 : i32
    %c0_i32_0 = arith.constant 0 : i32
    %c0_i32_1 = arith.constant 0 : i32
    return %c0_i32, %c0_i32_0 : i32, i32
  }
  func.func @transform_3(%arg0: i32) -> (i32, i32) {
    %c0_i32 = arith.constant 0 : i32
    %c0_i32_0 = arith.constant 0 : i32
    %c0_i32_1 = arith.constant 0 : i32
    return %c0_i32, %c0_i32_0 : i32, i32
  }
  func.func @transform_4(%arg0: i32) -> (i32, i32) {
    %c0_i32 = arith.constant 0 : i32
    %c0_i32_0 = arith.constant 0 : i32
    %c0_i32_1 = arith.constant 0 : i32
    return %c0_i32, %c0_i32_0 : i32, i32
  }
  func.func @transform_5(%arg0: i32) -> (i32, i32) {
    %c0_i32 = arith.constant 0 : i32
    %c0_i32_0 = arith.constant 0 : i32
    %c0_i32_1 = arith.constant 0 : i32
    return %c0_i32, %c0_i32_0 : i32, i32
  }
  func.func @transform_6(%arg0: i32) -> (i32, i32) {
    %c0_i32 = arith.constant 0 : i32
    %c0_i32_0 = arith.constant 0 : i32
    %c0_i32_1 = arith.constant 0 : i32
    return %c0_i32, %c0_i32_0 : i32, i32
  }
  func.func @transform_7(%arg0: i32) -> (i32, i32) {
    %c0_i32 = arith.constant 0 : i32
    %c0_i32_0 = arith.constant 0 : i32
    %c0_i32_1 = arith.constant 0 : i32
    return %c0_i32, %c0_i32_0 : i32, i32
  }
}

</mosaic_0001>

<llo_original>
// kernel: ccxn_forward.1
$region0: #{ccxn_forward.1}
  #allocation0 [shape = 'u32[]', space=smem, size = 0x4, offset = 0x4, fixed_abs, tag = 'smem constant byte address 0x4 - core index']
  #allocation1 [shape = 'u32[72,128]{1,0:T(1,128)}', space=vmem, size = 0x9000, scoped, tag = 'internal scratch']
  %s0 = inlined_call_operand.vmem [shape: bf16[128,128], index: 0, kind: input, shape index: {}]
  %s1 = inlined_call_operand.vmem [shape: bf16[128,128], index: 1, kind: input, shape index: {}]
  %s2 = inlined_call_operand.vmem [shape: bf16[128,128], index: 2, kind: input, shape index: {}]
  %s3 = inlined_call_operand.vmem [shape: bf16[128,128], index: 3, kind: input, shape index: {}]
  %s4 = inlined_call_operand.vmem [shape: bf16[128,128], index: 4, kind: input, shape index: {}]
  %s5 = inlined_call_operand.vmem [shape: bf16[16,128], index: 5, kind: input, shape index: {}]
  %s6 = inlined_call_operand.vmem [shape: f32[128,128], index: 6, kind: output, shape index: {0}]
  %s7 = inlined_call_operand.vmem [shape: f32[16,128], index: 7, kind: output, shape index: {1}]
  %8 = xla_tuple %s6, %s7
  %s9 = sld [smem:[#allocation0]]
  $region42: #{ccxn_forward.1} parent=0
    _
  %s11 = ssub.s32 1, %s9
  %s12 = scalar_select 0, %s11, %s9
  // Predicated region
  $region2: #{ccxn_forward.1} parent=0 // pred_check
    _
  $region3: #{ccxn_forward.1} parent=0 // pred_check_branch
    %14 = sbr.rel (0) target = $region5
  $region4: #{ccxn_forward.1} parent=0 // pred_region
    _
  $region5: #{ccxn_forward.1} parent=0 // pred_fallthru
    _
  // Predicated region
  $region6: #{ccxn_forward.1} parent=0 // pred_check
    _
  $region7: #{ccxn_forward.1} parent=0 // pred_check_branch
    %16 = sbr.rel (0) target = $region9
  $region8: #{ccxn_forward.1} parent=0 // pred_region
    _
  $region9: #{ccxn_forward.1} parent=0 // pred_fallthru
    _
  // Predicated region
  $region10: #{ccxn_forward.1} parent=0 // pred_check
    _
  $region11: #{ccxn_forward.1} parent=0 // pred_check_branch
    %18 = sbr.rel (0) target = $region13
  $region12: #{ccxn_forward.1} parent=0 // pred_region
    _
  $region13: #{ccxn_forward.1} parent=0 // pred_fallthru
    _
  // Predicated region
  $region14: #{ccxn_forward.1} parent=0 // pred_check
    _
  $region15: #{ccxn_forward.1} parent=0 // pred_check_branch
    %20 = sbr.rel (0) target = $region17
  $region16: #{ccxn_forward.1} parent=0 // pred_region
    _
  $region17: #{ccxn_forward.1} parent=0 // pred_fallthru
    _
  // Predicated region
  $region18: #{ccxn_forward.1} parent=0 // pred_check
    _
  $region19: #{ccxn_forward.1} parent=0 // pred_check_branch
    %22 = sbr.rel (0) target = $region21
  $region20: #{ccxn_forward.1} parent=0 // pred_region
    _
  $region21: #{ccxn_forward.1} parent=0 // pred_fallthru
    _
  // Predicated region
  $region22: #{ccxn_forward.1} parent=0 // pred_check
    _
  $region23: #{ccxn_forward.1} parent=0 // pred_check_branch
    %24 = sbr.rel (0) target = $region25
  $region24: #{ccxn_forward.1} parent=0 // pred_region
    _
  $region25: #{ccxn_forward.1} parent=0 // pred_fallthru
    _
  %v25 = vld [vmem:[%s0] sm:$0xf]
  %v26 = vld [vmem:[%s0 + $0x4] sm:$0xf]
  %v27 = vld [vmem:[%s0 + $0x8] sm:$0xf]
  %v28 = vld [vmem:[%s0 + $0xc] sm:$0xf]
  %v29 = vld [vmem:[%s0 + $0x10] sm:$0xf]
  %v30 = vld [vmem:[%s0 + $0x14] sm:$0xf]
  %v31 = vld [vmem:[%s0 + $0x18] sm:$0xf]
  %v32 = vld [vmem:[%s0 + $0x1c] sm:$0xf]
  %v33 = vld [vmem:[%s0 + $0x20] sm:$0xf]
  %v34 = vld [vmem:[%s0 + $0x24] sm:$0xf]
  %v35 = vld [vmem:[%s0 + $0x28] sm:$0xf]
  %v36 = vld [vmem:[%s0 + $0x2c] sm:$0xf]
  %v37 = vld [vmem:[%s0 + $0x30] sm:$0xf]
  %v38 = vld [vmem:[%s0 + $0x34] sm:$0xf]
  %v39 = vld [vmem:[%s0 + $0x38] sm:$0xf]
  %v40 = vld [vmem:[%s0 + $0x3c] sm:$0xf]
  %v41 = vld [vmem:[%s1] sm:$0xf]
  %v42 = vld [vmem:[%s1 + $0x4] sm:$0xf]
  %v43 = vld [vmem:[%s1 + $0x8] sm:$0xf]
  %v44 = vld [vmem:[%s1 + $0xc] sm:$0xf]
  %v45 = vld [vmem:[%s1 + $0x10] sm:$0xf]
  %v46 = vld [vmem:[%s1 + $0x14] sm:$0xf]
  %v47 = vld [vmem:[%s1 + $0x18] sm:$0xf]
  %v48 = vld [vmem:[%s1 + $0x1c] sm:$0xf]
  %v49 = vld [vmem:[%s1 + $0x20] sm:$0xf]
  %v50 = vld [vmem:[%s1 + $0x24] sm:$0xf]
  %v51 = vld [vmem:[%s1 + $0x28] sm:$0xf]
  %v52 = vld [vmem:[%s1 + $0x2c] sm:$0xf]
  %v53 = vld [vmem:[%s1 + $0x30] sm:$0xf]
  %v54 = vld [vmem:[%s1 + $0x34] sm:$0xf]
  %v55 = vld [vmem:[%s1 + $0x38] sm:$0xf]
  %v56 = vld [vmem:[%s1 + $0x3c] sm:$0xf]
  %v73 = vunpack.c.l.b16 %v25
  %v74 = vunpack.c.l.b16 %v26
  %v75 = vunpack.c.l.b16 %v27
  %v76 = vunpack.c.l.b16 %v28
  %v77 = vunpack.c.l.b16 %v29
  %v78 = vunpack.c.l.b16 %v30
  %v79 = vunpack.c.l.b16 %v31
  %v80 = vunpack.c.l.b16 %v32
  %v81 = vunpack.c.l.b16 %v33
  %v82 = vunpack.c.l.b16 %v34
  %v83 = vunpack.c.l.b16 %v35
  %v84 = vunpack.c.l.b16 %v36
  %v85 = vunpack.c.l.b16 %v37
  %v86 = vunpack.c.l.b16 %v38
  %v87 = vunpack.c.l.b16 %v39
  %v88 = vunpack.c.l.b16 %v40
  %v89 = vpack.c.b16 %v74, %v73
  %v90 = vpack.c.b16 %v76, %v75
  %v91 = vpack.c.b16 %v78, %v77
  %v92 = vpack.c.b16 %v80, %v79
  %v93 = vpack.c.b16 %v82, %v81
  %v94 = vpack.c.b16 %v84, %v83
  %v95 = vpack.c.b16 %v86, %v85
  %v96 = vpack.c.b16 %v88, %v87
  %v121 = vunpack.c.l.b16 %v41
  %v122 = vunpack.c.l.b16 %v42
  %v123 = vunpack.c.l.b16 %v43
  %v124 = vunpack.c.l.b16 %v44
  %v125 = vunpack.c.l.b16 %v45
  %v126 = vunpack.c.l.b16 %v46
  %v127 = vunpack.c.l.b16 %v47
  %v128 = vunpack.c.l.b16 %v48
  %v129 = vunpack.c.l.b16 %v49
  %v130 = vunpack.c.l.b16 %v50
  %v131 = vunpack.c.l.b16 %v51
  %v132 = vunpack.c.l.b16 %v52
  %v133 = vunpack.c.l.b16 %v53
  %v134 = vunpack.c.l.b16 %v54
  %v135 = vunpack.c.l.b16 %v55
  %v136 = vunpack.c.l.b16 %v56
  %v137 = vpack.c.b16 %v122, %v121
  %v138 = vpack.c.b16 %v124, %v123
  %v139 = vpack.c.b16 %v126, %v125
  %v140 = vpack.c.b16 %v128, %v127
  %v141 = vpack.c.b16 %v130, %v129
  %v142 = vpack.c.b16 %v132, %v131
  %v143 = vpack.c.b16 %v134, %v133
  %v144 = vpack.c.b16 %v136, %v135
  %153 = vmatpush.bf16.msra.mxu0 %v144
  %154 = vmatpush.bf16.msra.mxu0 %v143
  %155 = vmatpush.bf16.msra.mxu0 %v142
  %156 = vmatpush.bf16.msra.mxu0 %v141
  %157 = vmatpush.bf16.msra.mxu0 %v140
  %158 = vmatpush.bf16.msra.mxu0 %v139
  %159 = vmatpush.bf16.msra.mxu0 %v138
  %160 = vmatpush.bf16.msra.mxu0 %v137
  %161 = vmatmul.bf16.gmra.mxu0 %v89
  %v162 = vpop.f32.mrf.mxu0
  %v163 = vadd.f32 0.0, %v162
  %v164 = vpop.f32.mrf.mxu0
  %v165 = vadd.f32 0.0, %v164
  %166 = vmatmul.bf16.gmra.mxu0 %v90
  %v167 = vpop.f32.mrf.mxu0
  %v168 = vadd.f32 0.0, %v167
  %v169 = vpop.f32.mrf.mxu0
  %v170 = vadd.f32 0.0, %v169
  %171 = vmatmul.bf16.gmra.mxu0 %v91
  %v172 = vpop.f32.mrf.mxu0
  %v173 = vadd.f32 0.0, %v172
  %v174 = vpop.f32.mrf.mxu0
  %v175 = vadd.f32 0.0, %v174
  %176 = vmatmul.bf16.gmra.mxu0 %v92
  %v177 = vpop.f32.mrf.mxu0
  %v178 = vadd.f32 0.0, %v177
  %v179 = vpop.f32.mrf.mxu0
  %v180 = vadd.f32 0.0, %v179
  %181 = vmatmul.bf16.gmra.mxu0 %v93
  %v182 = vpop.f32.mrf.mxu0
  %v183 = vadd.f32 0.0, %v182
  %v184 = vpop.f32.mrf.mxu0
  %v185 = vadd.f32 0.0, %v184
  %186 = vmatmul.bf16.gmra.mxu0 %v94
  %v187 = vpop.f32.mrf.mxu0
  %v188 = vadd.f32 0.0, %v187
  %v189 = vpop.f32.mrf.mxu0
  %v190 = vadd.f32 0.0, %v189
  %191 = vmatmul.bf16.gmra.mxu0 %v95
  %v192 = vpop.f32.mrf.mxu0
  %v193 = vadd.f32 0.0, %v192
  %v194 = vpop.f32.mrf.mxu0
  %v195 = vadd.f32 0.0, %v194
  %196 = vmatmul.bf16.gmra.mxu0 %v96
  %v197 = vpop.f32.mrf.mxu0
  %v198 = vadd.f32 0.0, %v197
  %v199 = vpop.f32.mrf.mxu0
  %v200 = vadd.f32 0.0, %v199
  %201 = vdwg.mxu0
  %v202 = vld [vmem:[%s2] sm:$0xf]
  %v203 = vld [vmem:[%s2 + $0x4] sm:$0xf]
  %v204 = vld [vmem:[%s2 + $0x8] sm:$0xf]
  %v205 = vld [vmem:[%s2 + $0xc] sm:$0xf]
  %v206 = vld [vmem:[%s2 + $0x10] sm:$0xf]
  %v207 = vld [vmem:[%s2 + $0x14] sm:$0xf]
  %v208 = vld [vmem:[%s2 + $0x18] sm:$0xf]
  %v209 = vld [vmem:[%s2 + $0x1c] sm:$0xf]
  %v210 = vld [vmem:[%s2 + $0x20] sm:$0xf]
  %v211 = vld [vmem:[%s2 + $0x24] sm:$0xf]
  %v212 = vld [vmem:[%s2 + $0x28] sm:$0xf]
  %v213 = vld [vmem:[%s2 + $0x2c] sm:$0xf]
  %v214 = vld [vmem:[%s2 + $0x30] sm:$0xf]
  %v215 = vld [vmem:[%s2 + $0x34] sm:$0xf]
  %v216 = vld [vmem:[%s2 + $0x38] sm:$0xf]
  %v217 = vld [vmem:[%s2 + $0x3c] sm:$0xf]
  %v218 = vpack.c.bf16 %v165, %v163
  %v219 = vpack.c.bf16 %v170, %v168
  %v220 = vpack.c.bf16 %v175, %v173
  %v221 = vpack.c.bf16 %v180, %v178
  %v222 = vpack.c.bf16 %v185, %v183
  %v223 = vpack.c.bf16 %v190, %v188
  %v224 = vpack.c.bf16 %v195, %v193
  %v225 = vpack.c.bf16 %v200, %v198
  %v242 = vunpack.c.l.b16 %v202
  %v243 = vunpack.c.l.b16 %v203
  %v244 = vunpack.c.l.b16 %v204
  %v245 = vunpack.c.l.b16 %v205
  %v246 = vunpack.c.l.b16 %v206
  %v247 = vunpack.c.l.b16 %v207
  %v248 = vunpack.c.l.b16 %v208
  %v249 = vunpack.c.l.b16 %v209
  %v250 = vunpack.c.l.b16 %v210
  %v251 = vunpack.c.l.b16 %v211
  %v252 = vunpack.c.l.b16 %v212
  %v253 = vunpack.c.l.b16 %v213
  %v254 = vunpack.c.l.b16 %v214
  %v255 = vunpack.c.l.b16 %v215
  %v256 = vunpack.c.l.b16 %v216
  %v257 = vunpack.c.l.b16 %v217
  %v258 = vpack.c.b16 %v243, %v242
  %v259 = vpack.c.b16 %v245, %v244
  %v260 = vpack.c.b16 %v247, %v246
  %v261 = vpack.c.b16 %v249, %v248
  %v262 = vpack.c.b16 %v251, %v250
  %v263 = vpack.c.b16 %v253, %v252
  %v264 = vpack.c.b16 %v255, %v254
  %v265 = vpack.c.b16 %v257, %v256
  %274 = vmatpush.bf16.msra.mxu0 %v225
  %275 = vmatpush.bf16.msra.mxu0 %v224
  %276 = vmatpush.bf16.msra.mxu0 %v223
  %277 = vmatpush.bf16.msra.mxu0 %v222
  %278 = vmatpush.bf16.msra.mxu0 %v221
  %279 = vmatpush.bf16.msra.mxu0 %v220
  %280 = vmatpush.bf16.msra.mxu0 %v219
  %281 = vmatpush.bf16.msra.mxu0 %v218
  %282 = vmatmul.bf16.gmra.mxu0 %v258
  %v283 = vpop.f32.mrf.mxu0
  %v284 = vadd.f32 0.0, %v283
  %v285 = vpop.f32.mrf.mxu0
  %v286 = vadd.f32 0.0, %v285
  %287 = vmatmul.bf16.gmra.mxu0 %v259
  %v288 = vpop.f32.mrf.mxu0
  %v289 = vadd.f32 0.0, %v288
  %v290 = vpop.f32.mrf.mxu0
  %v291 = vadd.f32 0.0, %v290
  %292 = vmatmul.bf16.gmra.mxu0 %v260
  %v293 = vpop.f32.mrf.mxu0
  %v294 = vadd.f32 0.0, %v293
  %v295 = vpop.f32.mrf.mxu0
  %v296 = vadd.f32 0.0, %v295
  %297 = vmatmul.bf16.gmra.mxu0 %v261
  %v298 = vpop.f32.mrf.mxu0
  %v299 = vadd.f32 0.0, %v298
  %v300 = vpop.f32.mrf.mxu0
  %v301 = vadd.f32 0.0, %v300
  %302 = vmatmul.bf16.gmra.mxu0 %v262
  %v303 = vpop.f32.mrf.mxu0
  %v304 = vadd.f32 0.0, %v303
  %v305 = vpop.f32.mrf.mxu0
  %v306 = vadd.f32 0.0, %v305
  %307 = vmatmul.bf16.gmra.mxu0 %v263
  %v308 = vpop.f32.mrf.mxu0
  %v309 = vadd.f32 0.0, %v308
  %v310 = vpop.f32.mrf.mxu0
  %v311 = vadd.f32 0.0, %v310
  %312 = vmatmul.bf16.gmra.mxu0 %v264
  %v313 = vpop.f32.mrf.mxu0
  %v314 = vadd.f32 0.0, %v313
  %v315 = vpop.f32.mrf.mxu0
  %v316 = vadd.f32 0.0, %v315
  %317 = vmatmul.bf16.gmra.mxu0 %v265
  %v318 = vpop.f32.mrf.mxu0
  %v319 = vadd.f32 0.0, %v318
  %v320 = vpop.f32.mrf.mxu0
  %v321 = vadd.f32 0.0, %v320
  %322 = vdwg.mxu0
  %v323 = vmax.f32 %v284, 0.0
  %v324 = vmax.f32 %v286, 0.0
  %v325 = vmax.f32 %v289, 0.0
  %v326 = vmax.f32 %v291, 0.0
  %v327 = vmax.f32 %v294, 0.0
  %v328 = vmax.f32 %v296, 0.0
  %v329 = vmax.f32 %v299, 0.0
  %v330 = vmax.f32 %v301, 0.0
  %v331 = vmax.f32 %v304, 0.0
  %v332 = vmax.f32 %v306, 0.0
  %v333 = vmax.f32 %v309, 0.0
  %v334 = vmax.f32 %v311, 0.0
  %v335 = vmax.f32 %v314, 0.0
  %v336 = vmax.f32 %v316, 0.0
  %v337 = vmax.f32 %v319, 0.0
  %v338 = vmax.f32 %v321, 0.0
  %339 = vst [vmem:[%s6] sm:$0xff] %v323
  %340 = vst [vmem:[%s6 + $0x8] sm:$0xff] %v324
  %341 = vst [vmem:[%s6 + $0x10] sm:$0xff] %v325
  %342 = vst [vmem:[%s6 + $0x18] sm:$0xff] %v326
  %343 = vst [vmem:[%s6 + $0x20] sm:$0xff] %v327
  %344 = vst [vmem:[%s6 + $0x28] sm:$0xff] %v328
  %345 = vst [vmem:[%s6 + $0x30] sm:$0xff] %v329
  %346 = vst [vmem:[%s6 + $0x38] sm:$0xff] %v330
  %347 = vst [vmem:[%s6 + $0x40] sm:$0xff] %v331
  %348 = vst [vmem:[%s6 + $0x48] sm:$0xff] %v332
  %349 = vst [vmem:[%s6 + $0x50] sm:$0xff] %v333
  %350 = vst [vmem:[%s6 + $0x58] sm:$0xff] %v334
  %351 = vst [vmem:[%s6 + $0x60] sm:$0xff] %v335
  %352 = vst [vmem:[%s6 + $0x68] sm:$0xff] %v336
  %353 = vst [vmem:[%s6 + $0x70] sm:$0xff] %v337
  %354 = vst [vmem:[%s6 + $0x78] sm:$0xff] %v338
  %v355 = vld [vmem:[%s3] sm:$0xf]
  %v356 = vld [vmem:[%s3 + $0x4] sm:$0xf]
  %v357 = vld [vmem:[%s3 + $0x8] sm:$0xf]
  %v358 = vld [vmem:[%s3 + $0xc] sm:$0xf]
  %v359 = vld [vmem:[%s3 + $0x10] sm:$0xf]
  %v360 = vld [vmem:[%s3 + $0x14] sm:$0xf]
  %v361 = vld [vmem:[%s3 + $0x18] sm:$0xf]
  %v362 = vld [vmem:[%s3 + $0x1c] sm:$0xf]
  %v363 = vld [vmem:[%s3 + $0x20] sm:$0xf]
  %v364 = vld [vmem:[%s3 + $0x24] sm:$0xf]
  %v365 = vld [vmem:[%s3 + $0x28] sm:$0xf]
  %v366 = vld [vmem:[%s3 + $0x2c] sm:$0xf]
  %v367 = vld [vmem:[%s3 + $0x30] sm:$0xf]
  %v368 = vld [vmem:[%s3 + $0x34] sm:$0xf]
  %v369 = vld [vmem:[%s3 + $0x38] sm:$0xf]
  %v370 = vld [vmem:[%s3 + $0x3c] sm:$0xf]
  %v371 = vld [vmem:[%s4] sm:$0xf]
  %v372 = vld [vmem:[%s4 + $0x4] sm:$0xf]
  %v373 = vld [vmem:[%s4 + $0x8] sm:$0xf]
  %v374 = vld [vmem:[%s4 + $0xc] sm:$0xf]
  %v375 = vld [vmem:[%s4 + $0x10] sm:$0xf]
  %v376 = vld [vmem:[%s4 + $0x14] sm:$0xf]
  %v377 = vld [vmem:[%s4 + $0x18] sm:$0xf]
  %v378 = vld [vmem:[%s4 + $0x1c] sm:$0xf]
  %v379 = vld [vmem:[%s4 + $0x20] sm:$0xf]
  %v380 = vld [vmem:[%s4 + $0x24] sm:$0xf]
  %v381 = vld [vmem:[%s4 + $0x28] sm:$0xf]
  %v382 = vld [vmem:[%s4 + $0x2c] sm:$0xf]
  %v383 = vld [vmem:[%s4 + $0x30] sm:$0xf]
  %v384 = vld [vmem:[%s4 + $0x34] sm:$0xf]
  %v385 = vld [vmem:[%s4 + $0x38] sm:$0xf]
  %v386 = vld [vmem:[%s4 + $0x3c] sm:$0xf]
  %v403 = vunpack.c.l.b16 %v355
  %v404 = vunpack.c.l.b16 %v356
  %v405 = vunpack.c.l.b16 %v357
  %v406 = vunpack.c.l.b16 %v358
  %v407 = vunpack.c.l.b16 %v359
  %v408 = vunpack.c.l.b16 %v360
  %v409 = vunpack.c.l.b16 %v361
  %v410 = vunpack.c.l.b16 %v362
  %v411 = vunpack.c.l.b16 %v363
  %v412 = vunpack.c.l.b16 %v364
  %v413 = vunpack.c.l.b16 %v365
  %v414 = vunpack.c.l.b16 %v366
  %v415 = vunpack.c.l.b16 %v367
  %v416 = vunpack.c.l.b16 %v368
  %v417 = vunpack.c.l.b16 %v369
  %v418 = vunpack.c.l.b16 %v370
  %v419 = vpack.c.b16 %v404, %v403
  %v420 = vpack.c.b16 %v406, %v405
  %v421 = vpack.c.b16 %v408, %v407
  %v422 = vpack.c.b16 %v410, %v409
  %v423 = vpack.c.b16 %v412, %v411
  %v424 = vpack.c.b16 %v414, %v413
  %v425 = vpack.c.b16 %v416, %v415
  %v426 = vpack.c.b16 %v418, %v417
  %v451 = vunpack.c.l.b16 %v371
  %v452 = vunpack.c.l.b16 %v372
  %v453 = vunpack.c.l.b16 %v373
  %v454 = vunpack.c.l.b16 %v374
  %v455 = vunpack.c.l.b16 %v375
  %v456 = vunpack.c.l.b16 %v376
  %v457 = vunpack.c.l.b16 %v377
  %v458 = vunpack.c.l.b16 %v378
  %v459 = vunpack.c.l.b16 %v379
  %v460 = vunpack.c.l.b16 %v380
  %v461 = vunpack.c.l.b16 %v381
  %v462 = vunpack.c.l.b16 %v382
  %v463 = vunpack.c.l.b16 %v383
  %v464 = vunpack.c.l.b16 %v384
  %v465 = vunpack.c.l.b16 %v385
  %v466 = vunpack.c.l.b16 %v386
  %v467 = vpack.c.b16 %v452, %v451
  %v468 = vpack.c.b16 %v454, %v453
  %v469 = vpack.c.b16 %v456, %v455
  %v470 = vpack.c.b16 %v458, %v457
  %v471 = vpack.c.b16 %v460, %v459
  %v472 = vpack.c.b16 %v462, %v461
  %v473 = vpack.c.b16 %v464, %v463
  %v474 = vpack.c.b16 %v466, %v465
  %483 = vmatpush.bf16.msra.mxu0 %v474
  %484 = vmatpush.bf16.msra.mxu0 %v473
  %485 = vmatpush.bf16.msra.mxu0 %v472
  %486 = vmatpush.bf16.msra.mxu0 %v471
  %487 = vmatpush.bf16.msra.mxu0 %v470
  %488 = vmatpush.bf16.msra.mxu0 %v469
  %489 = vmatpush.bf16.msra.mxu0 %v468
  %490 = vmatpush.bf16.msra.mxu0 %v467
  %491 = vmatmul.bf16.gmra.mxu0 %v419
  %v492 = vpop.f32.mrf.mxu0
  %v493 = vadd.f32 0.0, %v492
  %v494 = vpop.f32.mrf.mxu0
  %v495 = vadd.f32 0.0, %v494
  %496 = vmatmul.bf16.gmra.mxu0 %v420
  %v497 = vpop.f32.mrf.mxu0
  %v498 = vadd.f32 0.0, %v497
  %v499 = vpop.f32.mrf.mxu0
  %v500 = vadd.f32 0.0, %v499
  %501 = vmatmul.bf16.gmra.mxu0 %v421
  %v502 = vpop.f32.mrf.mxu0
  %v503 = vadd.f32 0.0, %v502
  %v504 = vpop.f32.mrf.mxu0
  %v505 = vadd.f32 0.0, %v504
  %506 = vmatmul.bf16.gmra.mxu0 %v422
  %v507 = vpop.f32.mrf.mxu0
  %v508 = vadd.f32 0.0, %v507
  %v509 = vpop.f32.mrf.mxu0
  %v510 = vadd.f32 0.0, %v509
  %511 = vmatmul.bf16.gmra.mxu0 %v423
  %v512 = vpop.f32.mrf.mxu0
  %v513 = vadd.f32 0.0, %v512
  %v514 = vpop.f32.mrf.mxu0
  %v515 = vadd.f32 0.0, %v514
  %516 = vmatmul.bf16.gmra.mxu0 %v424
  %v517 = vpop.f32.mrf.mxu0
  %v518 = vadd.f32 0.0, %v517
  %v519 = vpop.f32.mrf.mxu0
  %v520 = vadd.f32 0.0, %v519
  %521 = vmatmul.bf16.gmra.mxu0 %v425
  %v522 = vpop.f32.mrf.mxu0
  %v523 = vadd.f32 0.0, %v522
  %v524 = vpop.f32.mrf.mxu0
  %v525 = vadd.f32 0.0, %v524
  %526 = vmatmul.bf16.gmra.mxu0 %v426
  %v527 = vpop.f32.mrf.mxu0
  %v528 = vadd.f32 0.0, %v527
  %v529 = vpop.f32.mrf.mxu0
  %v530 = vadd.f32 0.0, %v529
  %531 = vdwg.mxu0
  %v532 = vld [vmem:[%s5] sm:$0xf]
  %v533 = vld [vmem:[%s5 + $0x4] sm:$0xf]
  %v534 = vpack.c.bf16 %v495, %v493
  %v535 = vpack.c.bf16 %v500, %v498
  %v536 = vpack.c.bf16 %v505, %v503
  %v537 = vpack.c.bf16 %v510, %v508
  %v538 = vpack.c.bf16 %v515, %v513
  %v539 = vpack.c.bf16 %v520, %v518
  %v540 = vpack.c.bf16 %v525, %v523
  %v541 = vpack.c.bf16 %v530, %v528
  %v544 = vunpack.c.l.b16 %v532
  %v545 = vunpack.c.l.b16 %v533
  %v546 = vpack.c.b16 %v545, %v544
  %548 = vmatpush.bf16.msra.mxu0 %v541
  %549 = vmatpush.bf16.msra.mxu0 %v540
  %550 = vmatpush.bf16.msra.mxu0 %v539
  %551 = vmatpush.bf16.msra.mxu0 %v538
  %552 = vmatpush.bf16.msra.mxu0 %v537
  %553 = vmatpush.bf16.msra.mxu0 %v536
  %554 = vmatpush.bf16.msra.mxu0 %v535
  %555 = vmatpush.bf16.msra.mxu0 %v534
  %556 = vmatmul.bf16.gmra.mxu0 %v546
  %v557 = vpop.f32.mrf.mxu0
  %v558 = vadd.f32 0.0, %v557
  %v559 = vpop.f32.mrf.mxu0
  %v560 = vadd.f32 0.0, %v559
  %561 = vdwg.mxu0
  %v562 = vmax.f32 %v558, 0.0
  %v563 = vmax.f32 %v560, 0.0
  %564 = vst [vmem:[%s7] sm:$0xff] %v562
  %565 = vst [vmem:[%s7 + $0x8] sm:$0xff] %v563
  // Predicated region
  $region26: #{ccxn_forward.1} parent=0 // pred_check
    _
  $region27: #{ccxn_forward.1} parent=0 // pred_check_branch
    %567 = sbr.rel (0) target = $region29
  $region28: #{ccxn_forward.1} parent=0 // pred_region
    _
  $region29: #{ccxn_forward.1} parent=0 // pred_fallthru
    _
  // Predicated region
  $region30: #{ccxn_forward.1} parent=0 // pred_check
    _
  $region31: #{ccxn_forward.1} parent=0 // pred_check_branch
    %569 = sbr.rel (0) target = $region33
  $region32: #{ccxn_forward.1} parent=0 // pred_region
    _
  $region33: #{ccxn_forward.1} parent=0 // pred_fallthru
    _
  // Predicated region
  $region34: #{ccxn_forward.1} parent=0 // pred_check
    _
  $region35: #{ccxn_forward.1} parent=0 // pred_check_branch
    %571 = sbr.rel (0) target = $region37
  $region36: #{ccxn_forward.1} parent=0 // pred_region
    _
  $region37: #{ccxn_forward.1} parent=0 // pred_fallthru
    _
  // Predicated region
  $region38: #{ccxn_forward.1} parent=0 // pred_check
    _
  $region39: #{ccxn_forward.1} parent=0 // pred_check_branch
    %573 = sbr.rel (0) target = $region41
  $region40: #{ccxn_forward.1} parent=0 // pred_region
    _
  $region41: #{ccxn_forward.1} parent=0 // pred_fallthru
    _

</llo_original>
